<compile_context>
chip_gen: v7x
topology: tpu7x:2x2x1
jax: 0.10.0
libtpu: 0.0.40
codegen_flags: <defaults>
</compile_context>

<pallas_src>
import math

import jax
import jax.numpy as jnp
from jax.experimental import pallas as pl
from jax.experimental.pallas import tpu as pltpu


def _relu_add_kernel(x_ref, c_ref, o_ref):
    # Elementwise: relu(x + cache) on the current VMEM tile.
    o_ref[...] = jnp.maximum(x_ref[...] + c_ref[...], 0).astype(o_ref.dtype)


def relu_add_pallas(
    x: jax.Array,
    cache: jax.Array,
    *,
    lane_width: int = 512,        # multiple of 128 → lane-dense, unmasked stores
    max_tile_rows: int = 1024,    # 1024 x 512 x 4 B ≈ 2 MiB per tile
    vmem_limit_bytes: int = 32 * 1024 * 1024,
) -> jax.Array:
    """Computes relu(x + cache) elementwise with a tiled, pipelined Pallas kernel.

    x, cache: arrays of identical shape/dtype (any rank); returns same shape.
    """
    # TODO(synk): PyTorch would broadcast x + cache when only per-sample element
    # counts match (e.g. different batch); the hot path here requires equal shapes.
    assert x.shape == cache.shape and x.dtype == cache.dtype

    orig_shape = x.shape
    total = math.prod(orig_shape)

    # --- lane-dense 2-D layout: (rows_padded, W), W a multiple of 128 ---
    W = lane_width if total >= lane_width else 128
    rows = -(-total // W)                                   # ceil-div
    tile_r = min(max_tile_rows, -(-rows // 8) * 8)          # multiple of 8 sublanes
    rows_padded = -(-rows // tile_r) * tile_r               # grid divides evenly
    padded_total = rows_padded * W

    def to2d(a):
        flat = a.reshape(-1)
        if padded_total != total:
            flat = jnp.pad(flat, (0, padded_total - total))
        return flat.reshape(rows_padded, W)

    x2 = to2d(x)
    c2 = to2d(cache)

    spec = pl.BlockSpec((tile_r, W), lambda i: (i, 0))
    grid = (rows_padded // tile_r,)

    out2 = pl.pallas_call(
        _relu_add_kernel,
        out_shape=jax.ShapeDtypeStruct((rows_padded, W), x.dtype),
        grid=grid,
        in_specs=[spec, spec],
        out_specs=spec,
        compiler_params=pltpu.CompilerParams(
            dimension_semantics=("parallel",),
            vmem_limit_bytes=vmem_limit_bytes,
        ),
    )(x2, c2)

    out_flat = out2.reshape(-1)
    if padded_total != total:
        out_flat = out_flat[:total]
    return out_flat.reshape(orig_shape)


class Identity:
    """JAX/Pallas port of the stateful PyTorch Identity module."""

    def __init__(self):
        # torch.zeros(1, 1, 1, 1)
        self.cache = jnp.zeros((1, 1, 1, 1), dtype=jnp.float32)

    def forward(self, x: jax.Array) -> jax.Array:
        # NOTE: stateful (mutates self.cache in Python) — use eagerly, not under jax.jit.
        if math.prod(x.shape[1:]) != math.prod(self.cache.shape[1:]):
            # Shape mismatch: reset cache, pass input straight through.
            self.cache = x
            return self.cache
        # Hot path: relu(x + cache) computed in the Pallas kernel.
        self.cache = relu_add_pallas(x, self.cache)
        return self.cache

    __call__ = forward


if __name__ == "__main__":
    key = jax.random.PRNGKey(0)
    k1, k2 = jax.random.split(key)

    # Small NCHW inputs consistent with a conv-net feature map.
    x1 = jax.random.normal(k1, (2, 4, 16, 16), dtype=jnp.float32)
    x2 = jax.random.normal(k2, (2, 4, 16, 16), dtype=jnp.float32)

    mod = Identity()

    # First call: cache shape mismatch -> identity pass-through, cache = x1.
    y1 = jax.block_until_ready(mod(x1))
    assert jnp.array_equal(y1, x1)

    # Second call: same shape -> relu(x2 + cache) via the Pallas kernel.
    y2 = jax.block_until_ready(mod(x2))
    ref = jnp.maximum(x2 + x1, 0.0)
    assert jnp.allclose(y2, ref, atol=1e-6), "mismatch vs reference"

    # Third call: exercises the kernel again with the updated cache.
    y3 = jax.block_until_ready(mod(x1))
    ref3 = jnp.maximum(x1 + ref, 0.0)
    assert jnp.allclose(y3, ref3, atol=1e-6), "mismatch vs reference (step 3)"

    print("KERNEL_OK")
</pallas_src>

<mosaic_0001>
module attributes {stable_mosaic.version = 11 : i64} {
  func.func @_relu_add_kernel(%arg0: i32, %arg1: memref<8x512xf32, #tpu.memory_space<vmem>>, %arg2: memref<8x512xf32, #tpu.memory_space<vmem>>, %arg3: memref<8x512xf32, #tpu.memory_space<vmem>>) attributes {dimension_semantics = [#tpu.dimension_semantics<parallel>], iteration_bounds = array<i64: 1>, scalar_prefetch = 0 : i64, scratch_operands = 0 : i64, tpu.core_type = #tpu.core_type<tc>, window_params = [{transform_indices = @transform_0, window_bounds = array<i64: 8, 512>}, {transform_indices = @transform_1, window_bounds = array<i64: 8, 512>}, {transform_indices = @transform_2, window_bounds = array<i64: 8, 512>}]} {
    %c0 = arith.constant 0 : index
    %c0_0 = arith.constant 0 : index
    %0 = vector.load %arg1[%c0, %c0_0] : memref<8x512xf32, #tpu.memory_space<vmem>>, vector<8x512xf32>
    %c0_1 = arith.constant 0 : index
    %c0_2 = arith.constant 0 : index
    %1 = vector.load %arg2[%c0_1, %c0_2] : memref<8x512xf32, #tpu.memory_space<vmem>>, vector<8x512xf32>
    %2 = arith.addf %0, %1 : vector<8x512xf32>
    %cst = arith.constant 0.000000e+00 : f32
    %3 = vector.broadcast %cst : f32 to vector<8x512xf32>
    %4 = arith.maximumf %2, %3 : vector<8x512xf32>
    %c0_3 = arith.constant 0 : index
    %c0_4 = arith.constant 0 : index
    %5 = vector.load %arg3[%c0_3, %c0_4] : memref<8x512xf32, #tpu.memory_space<vmem>>, vector<8x512xf32>
    tpu.vector_store %arg3[%c0_3, %c0_4], %4 {strides = array<i32>} : memref<8x512xf32, #tpu.memory_space<vmem>>, vector<8x512xf32>,
    return
  }
  func.func @transform_0(%arg0: i32) -> (i32, i32) {
    %c0_i32 = arith.constant 0 : i32
    %c0_i32_0 = arith.constant 0 : i32
    return %arg0, %c0_i32 : i32, i32
  }
  func.func @transform_1(%arg0: i32) -> (i32, i32) {
    %c0_i32 = arith.constant 0 : i32
    %c0_i32_0 = arith.constant 0 : i32
    return %arg0, %c0_i32 : i32, i32
  }
  func.func @transform_2(%arg0: i32) -> (i32, i32) {
    %c0_i32 = arith.constant 0 : i32
    %c0_i32_0 = arith.constant 0 : i32
    return %arg0, %c0_i32 : i32, i32
  }
}

</mosaic_0001>

<llo_original>
// kernel: tpu_custom_call.1
$region0: #{tpu_custom_call.1}
  #allocation0 [shape = 'u32[]', space=smem, size = 0x4, offset = 0x4, fixed_abs, tag = 'smem constant byte address 0x4 - core index']
  #allocation1 [shape = 'u32[144,128]{1,0:T(1,128)}', space=vmem, size = 0x12000, scoped, tag = 'internal scratch']
  %s0 = inlined_call_operand.hbm [shape: f32[8,512], index: 0, kind: input, shape index: {}]
  %s1 = inlined_call_operand.hbm [shape: f32[8,512], index: 1, kind: input, shape index: {}]
  %s2 = inlined_call_operand.hbm [shape: f32[8,512], index: 2, kind: output, shape index: {}]
  %s3 = sld [smem:[#allocation0]]
  $region26: #{tpu_custom_call.1} parent=0
    _
  %s5 = ssub.s32 1, %s3
  %s6 = scalar_select 0, %s5, %s3
  $region1: #{tpu_custom_call.1} parent=0
    #allocation2 [shape = 'u8[16384]{0}', space=vmem, size = 0x4000, scoped, tag = 'input window, operand 0, single buffered']
    #allocation3 [shape = 's32[1]{0}', space=sflag, size = 0x4, scoped, tag = 'scoped memory for tpu_custom_call.1']
    #allocation4 [shape = 's32[1]{0}', space=sflag, size = 0x4, scoped, tag = 'scoped memory for tpu_custom_call.1']
    #allocation5 [shape = 'u8[16384]{0}', space=vmem, size = 0x4000, scoped, tag = 'input window, operand 1, single buffered']
    #allocation6 [shape = 's32[1]{0}', space=sflag, size = 0x4, scoped, tag = 'scoped memory for tpu_custom_call.1']
    #allocation7 [shape = 'u8[16384]{0}', space=vmem, size = 0x4000, scoped, tag = 'output window, operand 0, single buffered']
    %7 = vsyncpa [#allocation3], 0
    %8 = vsyncpa [#allocation6], 0
    %9 = vsyncpa [#allocation4], 0
    // Predicated region
    $region2: #{tpu_custom_call.1} parent=1 // pred_check
      _
    $region3: #{tpu_custom_call.1} parent=1 // pred_check_branch
      %11 = sbr.rel (0) target = $region5
    $region4: #{tpu_custom_call.1} parent=1 // pred_region
      %s13 = ssub.s32 512, 512
      %14 = vsyncadd [#allocation3], %s13
      %s16 = sshll.u32 [#allocation2], 4
      %s17 = int_to_ptr.vmem [resolvable:$true] %s16
      %19 = dma.hbm_to_vmem [thread:$0]  %s0, 512, %s17, [#allocation3]
    $region5: #{tpu_custom_call.1} parent=1 // pred_fallthru
      _
    // Predicated region
    $region6: #{tpu_custom_call.1} parent=1 // pred_check
      _
    $region7: #{tpu_custom_call.1} parent=1 // pred_check_branch
      %21 = sbr.rel (0) target = $region9
    $region8: #{tpu_custom_call.1} parent=1 // pred_region
      %s23 = ssub.s32 512, 512
      %24 = vsyncadd [#allocation6], %s23
      %s26 = sshll.u32 [#allocation5], 4
      %s27 = int_to_ptr.vmem [resolvable:$true] %s26
      %29 = dma.hbm_to_vmem [thread:$0]  %s1, 512, %s27, [#allocation6]
    $region9: #{tpu_custom_call.1} parent=1 // pred_fallthru
      _
    // Predicated region
    $region10: #{tpu_custom_call.1} parent=1 // pred_check
      _
    $region11: #{tpu_custom_call.1} parent=1 // pred_check_branch
      %31 = sbr.rel (0) target = $region13
    $region12: #{tpu_custom_call.1} parent=1 // pred_region
      %32 = dma.done [#allocation3], 512
    $region13: #{tpu_custom_call.1} parent=1 // pred_fallthru
      _
    // Predicated region
    $region14: #{tpu_custom_call.1} parent=1 // pred_check
      _
    $region15: #{tpu_custom_call.1} parent=1 // pred_check_branch
      %34 = sbr.rel (0) target = $region17
    $region16: #{tpu_custom_call.1} parent=1 // pred_region
      %35 = dma.done [#allocation6], 512
    $region17: #{tpu_custom_call.1} parent=1 // pred_fallthru
      _
    %v36 = vld [vmem:[#allocation2] sm:$0xff]
    %v37 = vld [vmem:[#allocation2 + $0x8] sm:$0xff]
    %v38 = vld [vmem:[#allocation2 + $0x10] sm:$0xff]
    %v39 = vld [vmem:[#allocation2 + $0x18] sm:$0xff]
    %v40 = vld [vmem:[#allocation5] sm:$0xff]
    %v41 = vld [vmem:[#allocation5 + $0x8] sm:$0xff]
    %v42 = vld [vmem:[#allocation5 + $0x10] sm:$0xff]
    %v43 = vld [vmem:[#allocation5 + $0x18] sm:$0xff]
    %v44 = vadd.f32 %v36, %v40
    %v45 = vadd.f32 %v37, %v41
    %v46 = vadd.f32 %v38, %v42
    %v47 = vadd.f32 %v39, %v43
    %v48 = vmax.f32 %v44, 0.0
    %v49 = vmax.f32 %v45, 0.0
    %v50 = vmax.f32 %v46, 0.0
    %v51 = vmax.f32 %v47, 0.0
    %52 = vst [vmem:[#allocation7] sm:$0xff] %v48
    %53 = vst [vmem:[#allocation7 + $0x8] sm:$0xff] %v49
    %54 = vst [vmem:[#allocation7 + $0x10] sm:$0xff] %v50
    %55 = vst [vmem:[#allocation7 + $0x18] sm:$0xff] %v51
    // Predicated region
    $region18: #{tpu_custom_call.1} parent=1 // pred_check
      _
    $region19: #{tpu_custom_call.1} parent=1 // pred_check_branch
      %57 = sbr.rel (0) target = $region21
    $region20: #{tpu_custom_call.1} parent=1 // pred_region
      %s59 = ssub.s32 512, 512
      %60 = vsyncadd [#allocation4], %s59
      %s62 = sshll.u32 [#allocation7], 4
      %s63 = int_to_ptr.vmem [resolvable:$true] %s62
      %65 = dma.vmem_to_hbm [thread:$0]  %s63, 512, %s2, [#allocation4]
    $region21: #{tpu_custom_call.1} parent=1 // pred_fallthru
      _
    // Predicated region
    $region22: #{tpu_custom_call.1} parent=1 // pred_check
      _
    $region23: #{tpu_custom_call.1} parent=1 // pred_check_branch
      %67 = sbr.rel (0) target = $region25
    $region24: #{tpu_custom_call.1} parent=1 // pred_region
      %68 = dma.done [#allocation4], 512
    $region25: #{tpu_custom_call.1} parent=1 // pred_fallthru
      _
    %69 = vsyncpa [#allocation3], 1
    %70 = vsyncpa [#allocation6], 1
    %71 = vsyncpa [#allocation4], 1

</llo_original>
